<compile_context>
chip_gen: v7x
topology: tpu7x:2x2x1
jax: 0.10.0
libtpu: 0.0.40
codegen_flags: <defaults>
</compile_context>

<pallas_src>
import math
import functools

import jax
import jax.numpy as jnp
from jax import lax
from jax.experimental import pallas as pl
from jax.experimental.pallas import tpu as pltpu


def _make_pe_table(max_len: int, d_model: int) -> jnp.ndarray:
    """Deterministic sinusoidal positional-encoding table (max_len, d_model)."""
    position = jnp.arange(0, max_len, dtype=jnp.float32)[:, None]            # (L, 1)
    div_term = jnp.exp(
        jnp.arange(0, d_model, 2, dtype=jnp.float32)
        * -(math.log(10000.0) / d_model)
    )                                                                         # (D/2,)
    pe = jnp.zeros((max_len, d_model), dtype=jnp.float32)
    pe = pe.at[:, 0::2].set(jnp.sin(position * div_term))
    pe = pe.at[:, 1::2].set(jnp.cos(position * div_term))
    return pe


def _pe_dropout_kernel(seed_ref, x_ref, pe_ref, o_ref, *,
                       p: float, training: bool,
                       tb: int, tl: int, row_stride: int):
    # x_ref/o_ref: (TB, TL) lane-dense flattened tile; pe_ref: (1, TL).
    y = x_ref[...] + pe_ref[...]          # sublane-broadcast add (single VPU stream)

    if training and p > 0.0:
        # Counter-based dropout: hash(global element index ^ seed) -> uint32,
        # keep iff hash >= round(p * 2^32). Pure integer VPU ops, deterministic,
        # independent of grid iteration order.
        b0 = pl.program_id(0) * tb
        l0 = pl.program_id(1) * tl
        rows = lax.broadcasted_iota(jnp.int32, y.shape, 0) + b0
        cols = lax.broadcasted_iota(jnp.int32, y.shape, 1) + l0
        idx = (rows * row_stride + cols).astype(jnp.uint32)

        h = idx ^ seed_ref[0].astype(jnp.uint32)
        # lowbias32 / splitmix-style avalanche finalizer.
        h = (h ^ (h >> jnp.uint32(16))) * jnp.uint32(0x7FEB352D)
        h = (h ^ (h >> jnp.uint32(15))) * jnp.uint32(0x846CA68B)
        h = h ^ (h >> jnp.uint32(16))

        threshold = jnp.uint32(min(int(round(p * 4294967296.0)), 4294967295))
        keep = h >= threshold
        y = jnp.where(keep, y * jnp.float32(1.0 / (1.0 - p)), jnp.float32(0.0))

    o_ref[...] = y.astype(o_ref.dtype)


def _choose_tiles(B: int, L: int, itemsize: int):
    # Second-minor block dim must be a multiple of 8 or the full dim.
    TB = B if B <= 8 else 8
    # ~1 MiB per x tile -> double-buffered in/out stays far under the default
    # scoped VMEM on every generation (16 MiB v5e, 32 MiB v6e/v7x).
    target_elems = max(128, (1 << 20) // itemsize // TB)
    if L <= target_elems:
        TL = L                                  # full dim: always layout-legal
    else:
        TL = max(128, (target_elems // 128) * 128)   # lane-aligned chunk
    return TB, TL


def positional_encoding_forward(x, pe, *, p: float, training: bool, seed: int = 0):
    """x: (B, S, D); pe: (max_len, D) with max_len >= S."""
    B, S, D = x.shape
    assert S <= pe.shape[0], f"sequence length {S} exceeds max_len {pe.shape[0]}"

    L = S * D
    x2 = x.reshape(B, L)                              # lane-dense flatten (free)
    pe2 = pe[:S].astype(x.dtype).reshape(1, L)        # broadcast row per batch

    TB, TL = _choose_tiles(B, L, x.dtype.itemsize)
    grid = (pl.cdiv(B, TB), pl.cdiv(L, TL))
    row_stride = pl.cdiv(L, TL) * TL                  # unique counter per element

    kernel = functools.partial(
        _pe_dropout_kernel, p=float(p), training=bool(training),
        tb=TB, tl=TL, row_stride=int(row_stride))
    seed_arr = jnp.asarray([seed], dtype=jnp.int32)

    cost = pl.CostEstimate(
        flops=2 * B * L, transcendentals=0,
        bytes_accessed=(2 * B * L + L) * x.dtype.itemsize)

    out2 = pl.pallas_call(
        kernel,
        out_shape=jax.ShapeDtypeStruct((B, L), x.dtype),
        grid_spec=pltpu.PrefetchScalarGridSpec(
            num_scalar_prefetch=1,
            grid=grid,
            in_specs=[
                pl.BlockSpec((TB, TL), lambda bi, li, seed: (bi, li)),  # x
                pl.BlockSpec((1, TL), lambda bi, li, seed: (0, li)),    # pe row
            ],
            out_specs=pl.BlockSpec((TB, TL), lambda bi, li, seed: (bi, li)),
        ),
        compiler_params=pltpu.CompilerParams(
            dimension_semantics=("parallel", "parallel"),
        ),
        cost_estimate=cost,
    )(seed_arr, x2, pe2)

    return out2.reshape(B, S, D)


if __name__ == "__main__":
    B, S, D = 2, 8, 32
    MAX_LEN = 64
    DROPOUT_P = 0.1

    key = jax.random.PRNGKey(0)
    x = jax.random.normal(key, (B, S, D), dtype=jnp.float32)
    pe = _make_pe_table(MAX_LEN, D)

    # Eval mode (dropout = identity): exact check against x + pe[:S].
    out_eval = positional_encoding_forward(x, pe, p=DROPOUT_P, training=False)
    out_eval = jax.block_until_ready(out_eval)
    ref = x + pe[None, :S, :]
    assert jnp.allclose(out_eval, ref, atol=1e-6), "eval-mode mismatch"

    # Train mode (inverted dropout, deterministic seed).
    out_train = positional_encoding_forward(x, pe, p=DROPOUT_P, training=True, seed=0)
    out_train = jax.block_until_ready(out_train)
    assert out_train.shape == (B, S, D)

    kept = out_train != 0
    ref_scaled = ref / (1.0 - DROPOUT_P)
    assert jnp.allclose(jnp.where(kept, out_train, ref_scaled), ref_scaled,
                        atol=1e-5), "train-mode kept-value mismatch"
    frac = float(jnp.mean(kept.astype(jnp.float32)))
    assert 0.6 < frac <= 1.0, f"implausible keep fraction {frac}"

    print("KERNEL_OK")
</pallas_src>

<mosaic_0001>
module attributes {stable_mosaic.version = 11 : i64} {
  func.func @_pe_dropout_kernel(%arg0: i32, %arg1: i32, %arg2: memref<1xi32, #tpu.memory_space<smem>>, %arg3: memref<2x256xf32, #tpu.memory_space<vmem>>, %arg4: memref<1x256xf32, #tpu.memory_space<vmem>>, %arg5: memref<2x256xf32, #tpu.memory_space<vmem>>) attributes {dimension_semantics = [#tpu.dimension_semantics<parallel>, #tpu.dimension_semantics<parallel>], iteration_bounds = array<i64: 1, 1>, scalar_prefetch = 1 : i64, scratch_operands = 0 : i64, tpu.core_type = #tpu.core_type<tc>, window_params = [{transform_indices = @transform_0, window_bounds = array<i64: 2, 256>}, {transform_indices = @transform_1, window_bounds = array<i64: 1, 256>}, {transform_indices = @transform_2, window_bounds = array<i64: 2, 256>}]} {
    %c0 = arith.constant 0 : index
    %c0_0 = arith.constant 0 : index
    %0 = vector.load %arg3[%c0, %c0_0] : memref<2x256xf32, #tpu.memory_space<vmem>>, vector<2x256xf32>
    %c0_1 = arith.constant 0 : index
    %c0_2 = arith.constant 0 : index
    %1 = vector.load %arg4[%c0_1, %c0_2] : memref<1x256xf32, #tpu.memory_space<vmem>>, vector<1x256xf32>
    %2 = vector.broadcast %1 : vector<1x256xf32> to vector<2x256xf32>
    %3 = arith.addf %0, %2 : vector<2x256xf32>
    %c0_3 = arith.constant 0 : index
    %c0_4 = arith.constant 0 : index
    %4 = vector.load %arg5[%c0_3, %c0_4] : memref<2x256xf32, #tpu.memory_space<vmem>>, vector<2x256xf32>
    tpu.vector_store %arg5[%c0_3, %c0_4], %3 {strides = array<i32>} : memref<2x256xf32, #tpu.memory_space<vmem>>, vector<2x256xf32>,
    return
  }
  func.func @transform_0(%arg0: i32, %arg1: i32, %arg2: memref<1xi32, #tpu.memory_space<smem>>) -> (i32, i32) {
    %c0_i32 = arith.constant 0 : i32
    return %arg0, %arg1 : i32, i32
  }
  func.func @transform_1(%arg0: i32, %arg1: i32, %arg2: memref<1xi32, #tpu.memory_space<smem>>) -> (i32, i32) {
    %c0_i32 = arith.constant 0 : i32
    %c0_i32_0 = arith.constant 0 : i32
    return %c0_i32, %arg1 : i32, i32
  }
  func.func @transform_2(%arg0: i32, %arg1: i32, %arg2: memref<1xi32, #tpu.memory_space<smem>>) -> (i32, i32) {
    %c0_i32 = arith.constant 0 : i32
    return %arg0, %arg1 : i32, i32
  }
}

</mosaic_0001>

<llo_original>
// kernel: tpu_custom_call.1
$region0: #{tpu_custom_call.1}
  #allocation0 [shape = 'u32[]', space=smem, size = 0x4, offset = 0x4, fixed_abs, tag = 'smem constant byte address 0x4 - core index']
  #allocation1 [shape = 'u32[144,128]{1,0:T(1,128)}', space=vmem, size = 0x12000, scoped, tag = 'internal scratch']
  #allocation2 [shape = 's32[1]{0}', space=sflag, size = 0x4, scoped, tag = 'scoped memory for tpu_custom_call.1']
  #allocation3 [shape = 's32[1]{0:T(128)S(6)}', space=smem, size = 0x200, scoped, tag = 'prefetched SMEM operand 0']
  %s0 = inlined_call_operand.<no memory space> [shape: s32[1], index: 0, kind: input, shape index: {}]
  %s1 = inlined_call_operand.hbm [shape: f32[2,256], index: 1, kind: input, shape index: {}]
  %s2 = inlined_call_operand.vmem [shape: f32[1,256], index: 2, kind: input, shape index: {}]
  %s3 = inlined_call_operand.hbm [shape: f32[2,256], index: 3, kind: output, shape index: {}]
  %s4 = sld [smem:[#allocation0]]
  $region22: #{tpu_custom_call.1} parent=0
    _
  %s6 = ssub.s32 1, %s4
  %s7 = scalar_select 0, %s6, %s4
  %8 = sst [smem:[#allocation3]] %s0
  $region1: #{tpu_custom_call.1} parent=0
    #allocation4 [shape = 'u8[2048]{0}', space=vmem, size = 0x800, scoped, tag = 'input window, operand 1, single buffered']
    #allocation5 [shape = 's32[1]{0}', space=sflag, size = 0x4, scoped, tag = 'scoped memory for tpu_custom_call.1']
    #allocation6 [shape = 's32[1]{0}', space=sflag, size = 0x4, scoped, tag = 'scoped memory for tpu_custom_call.1']
    #allocation7 [shape = 'u8[2048]{0}', space=vmem, size = 0x800, scoped, tag = 'output window, operand 0, single buffered']
    %9 = vsyncpa [#allocation5], 0
    %10 = vsyncpa [#allocation6], 0
    // Predicated region
    $region2: #{tpu_custom_call.1} parent=1 // pred_check
      _
    $region3: #{tpu_custom_call.1} parent=1 // pred_check_branch
      %12 = sbr.rel (0) target = $region5
    $region4: #{tpu_custom_call.1} parent=1 // pred_region
      %s14 = ssub.s32 64, 64
      %15 = vsyncadd [#allocation5], %s14
      %s17 = sshll.u32 [#allocation4], 4
      %s18 = int_to_ptr.vmem [resolvable:$true] %s17
      %20 = dma.hbm_to_vmem [thread:$0]  %s1, 64, %s18, [#allocation5]
    $region5: #{tpu_custom_call.1} parent=1 // pred_fallthru
      _
    // Predicated region
    $region6: #{tpu_custom_call.1} parent=1 // pred_check
      _
    $region7: #{tpu_custom_call.1} parent=1 // pred_check_branch
      %22 = sbr.rel (0) target = $region9
    $region8: #{tpu_custom_call.1} parent=1 // pred_region
      _
    $region9: #{tpu_custom_call.1} parent=1 // pred_fallthru
      _
    // Predicated region
    $region10: #{tpu_custom_call.1} parent=1 // pred_check
      _
    $region11: #{tpu_custom_call.1} parent=1 // pred_check_branch
      %24 = sbr.rel (0) target = $region13
    $region12: #{tpu_custom_call.1} parent=1 // pred_region
      %25 = dma.done [#allocation5], 64
    $region13: #{tpu_custom_call.1} parent=1 // pred_fallthru
      _
    %v26 = vld [vmem:[#allocation4] sm:$0xf]
    %v27 = vld [vmem:[%s2] sm:$0x3]
    %v29 = vlaneseq
    %v30 = vshrl.u32 %v29, 7
    %v31 = vsub.s32 0, %v30
    %v32 = vrot.slane %v27, %v31
    %v33 = vlaneseq
    %v34 = vshrl.u32 %v33, 7
    %v35 = vsub.s32 1, %v34
    %v36 = vrot.slane %v27, %v35
    %v37 = vcombine.low %v32, %v36
    %v39 = vunpack.c.l.s4 1983009808
    %v40 = vunpack.c.0.s8 %v39
    %v41 = vlaneseq
    %v42 = vshrl.u32 %v41, 7
    %v43 = vsub.s32 %v40, %v42
    %v44 = vrot.slane %v37, %v43
    %v46 = vadd.f32 %v26, %v44
    %47 = vst [vmem:[#allocation7] sm:$0xf] %v46
    // Predicated region
    $region14: #{tpu_custom_call.1} parent=1 // pred_check
      _
    $region15: #{tpu_custom_call.1} parent=1 // pred_check_branch
      %49 = sbr.rel (0) target = $region17
    $region16: #{tpu_custom_call.1} parent=1 // pred_region
      %s51 = ssub.s32 64, 64
      %52 = vsyncadd [#allocation6], %s51
      %s54 = sshll.u32 [#allocation7], 4
      %s55 = int_to_ptr.vmem [resolvable:$true] %s54
      %57 = dma.vmem_to_hbm [thread:$0]  %s55, 64, %s3, [#allocation6]
    $region17: #{tpu_custom_call.1} parent=1 // pred_fallthru
      _
    // Predicated region
    $region18: #{tpu_custom_call.1} parent=1 // pred_check
      _
    $region19: #{tpu_custom_call.1} parent=1 // pred_check_branch
      %59 = sbr.rel (0) target = $region21
    $region20: #{tpu_custom_call.1} parent=1 // pred_region
      %60 = dma.done [#allocation6], 64
    $region21: #{tpu_custom_call.1} parent=1 // pred_fallthru
      _
    %61 = vsyncpa [#allocation5], 1
    %62 = vsyncpa [#allocation6], 1

</llo_original>
